<compile_context>
chip_gen: v5e
topology: v5e:2x2
jax: 0.10.0
libtpu: 0.0.40
codegen_flags: <defaults>
</compile_context>

<pallas_src>
import math

import numpy as np
import jax
import jax.numpy as jnp
from jax.experimental import pallas as pl
from jax.experimental.pallas import tpu as pltpu

# ----------------------------- configuration (small synthetic shapes) -----------------------------
B = 2
L_SEQ = 16
D_MODEL = 32
N_HEADS = 4
D_FF = 64
MOVING_AVG = 5          # odd kernel for series_decomp


# --------------------------------------- Pallas kernel --------------------------------------------
def _encoder_layer_kernel(x_ref, wqkv_ref, bqkv_ref, wo_ref, bo_ref,
                          w1_ref, w2_ref, avg_ref, out_ref):
    rows, d = x_ref.shape               # rows = (#batches in this tile) * L_SEQ
    bt = rows // L_SEQ                  # batches handled by this grid step
    e = d // N_HEADS
    scale = 1.0 / math.sqrt(e)

    x = x_ref[...]                      # (rows, d) f32 activations, 2D layout end-to-end
    avg = avg_ref[...]                  # (rows, rows) f32 block-diag banded averaging matrix

    # ---------------- self-attention: fused QKV, batched heads, single out-proj ----------------
    x_bf = x.astype(jnp.bfloat16)       # cast once, reused for the fused projection
    qkv = jnp.dot(x_bf, wqkv_ref[...],
                  preferred_element_type=jnp.float32) + bqkv_ref[...]   # (rows, 3d) f32

    def split_heads(col0):
        # lane-slice each head and stack heads on a leading batch axis -> (H*bt, L, E)
        return jnp.concatenate(
            [qkv[:, col0 + h * e: col0 + (h + 1) * e].reshape(bt, L_SEQ, e)
             for h in range(N_HEADS)], axis=0).astype(jnp.bfloat16)

    qh = split_heads(0)                 # (H*bt, L, E) bf16
    kh = split_heads(d)
    vh = split_heads(2 * d)

    s = jnp.einsum("nqe,nke->nqk", qh, kh,
                   preferred_element_type=jnp.float32) * scale          # (H*bt, L, L) f32
    s = s - jnp.max(s, axis=-1, keepdims=True)                          # f32 softmax
    p_un = jnp.exp(s)
    probs = p_un * pl.reciprocal(jnp.sum(p_un, axis=-1, keepdims=True), approx=True)
    ctx = jnp.einsum("nqk,nke->nqe", probs.astype(jnp.bfloat16), vh,
                     preferred_element_type=jnp.float32)                # (H*bt, L, E) f32

    # lane-concat the head contexts back to (rows, d): one K=d output projection on the MXU
    ctx2 = jnp.concatenate(
        [ctx[h * bt:(h + 1) * bt].reshape(rows, e) for h in range(N_HEADS)], axis=1)
    attn_out = jnp.dot(ctx2.astype(jnp.bfloat16), wo_ref[...],
                       preferred_element_type=jnp.float32) + bo_ref[...]

    # ---------------- decomp1: res = z - moving_avg(z), as one banded f32 matmul ----------------
    z1 = x + attn_out
    res = z1 - jnp.dot(avg, z1, preferred_element_type=jnp.float32)

    # ---------------- FFN: Conv1d(k=1, no bias) -> relu -> Conv1d(k=1, no bias) ----------------
    h1 = jnp.maximum(jnp.dot(res.astype(jnp.bfloat16), w1_ref[...],
                             preferred_element_type=jnp.float32), 0.0)
    y = jnp.dot(h1.astype(jnp.bfloat16), w2_ref[...],
                preferred_element_type=jnp.float32)

    # ---------------- decomp2 ----------------
    z2 = res + y
    out_ref[...] = (z2 - jnp.dot(avg, z2, preferred_element_type=jnp.float32)
                    ).astype(out_ref.dtype)


def encoder_layer_pallas(x, p, rows_per_tile=None):
    """Runs the whole EncoderLayer as one Pallas call over row tiles of the folded (B*L, D)
    activations.  At toy shapes the single tile covers everything (weights + activations stay
    resident in VMEM, no HBM round-trips between sub-ops)."""
    Bn, L, D = x.shape
    BL = Bn * L
    if rows_per_tile is None:
        rows_per_tile = BL                       # one grid step at these shapes
    assert rows_per_tile % L == 0 and BL % rows_per_tile == 0
    n_tiles = BL // rows_per_tile

    x2d = x.reshape(BL, D)                       # host-side fold: 2D layout inside the kernel

    row_spec = pl.BlockSpec((rows_per_tile, D), lambda i: (i, 0))
    full = lambda a: pl.BlockSpec(a.shape, lambda i, nd=a.ndim: (0,) * nd)
    avg_spec = pl.BlockSpec((rows_per_tile, rows_per_tile), lambda i: (i, i))

    out2d = pl.pallas_call(
        _encoder_layer_kernel,
        out_shape=jax.ShapeDtypeStruct((BL, D), jnp.float32),
        grid=(n_tiles,),
        in_specs=[row_spec,
                  full(p["wqkv"]), full(p["bqkv"]),
                  full(p["wo"]), full(p["bo"]),
                  full(p["w1"]), full(p["w2"]),
                  avg_spec],
        out_specs=row_spec,
        compiler_params=pltpu.CompilerParams(dimension_semantics=("parallel",)),
    )(x2d, p["wqkv"], p["bqkv"], p["wo"], p["bo"], p["w1"], p["w2"], p["avg"])
    return out2d.reshape(Bn, L, D)


# ------------------------------------ plain-jnp reference -----------------------------------------
def encoder_layer_ref(x, p):
    """Independent reference mirroring the PyTorch module structure: separate Q/K/V matmuls,
    a per-head loop, and the concatenate-based replicate-padded moving average (exact f32).
    Uses the same bf16 weight values as the kernel (documented precision trade-off)."""
    Bn, L, D = x.shape
    E = D // N_HEADS
    scale = 1.0 / math.sqrt(E)
    wq, wk, wv = p["wqkv"][:, :D], p["wqkv"][:, D:2 * D], p["wqkv"][:, 2 * D:]
    bq, bk, bv = p["bqkv"][:, :D], p["bqkv"][:, D:2 * D], p["bqkv"][:, 2 * D:]

    def attention(v_in):
        xf = v_in.reshape(Bn * L, D).astype(jnp.bfloat16)
        q = jnp.dot(xf, wq, preferred_element_type=jnp.float32) + bq
        k = jnp.dot(xf, wk, preferred_element_type=jnp.float32) + bk
        v = jnp.dot(xf, wv, preferred_element_type=jnp.float32) + bv
        out = jnp.zeros((Bn * L, D), jnp.float32)
        for h in range(N_HEADS):
            sl = slice(h * E, (h + 1) * E)
            qh = q[:, sl].reshape(Bn, L, E).astype(jnp.bfloat16)
            kh = k[:, sl].reshape(Bn, L, E).astype(jnp.bfloat16)
            vh = v[:, sl].reshape(Bn, L, E).astype(jnp.bfloat16)
            s = jnp.einsum("bqe,bke->bqk", qh, kh,
                           preferred_element_type=jnp.float32) * scale
            a = jax.nn.softmax(s, axis=-1)
            ctx = jnp.einsum("bqk,bke->bqe", a.astype(jnp.bfloat16), vh,
                             preferred_element_type=jnp.float32)
            out = out + jnp.dot(ctx.reshape(Bn * L, E).astype(jnp.bfloat16),
                                p["wo"][sl, :], preferred_element_type=jnp.float32)
        return (out + p["bo"]).reshape(Bn, L, D)

    def moving_mean(v_in):
        pad = (MOVING_AVG - 1) // 2
        front = jnp.broadcast_to(v_in[:, 0:1, :], (Bn, pad, D))
        end = jnp.broadcast_to(v_in[:, L - 1:L, :], (Bn, pad, D))
        vp = jnp.concatenate([front, v_in, end], axis=1)
        m = vp[:, 0:L, :]
        for j in range(1, MOVING_AVG):
            m = m + vp[:, j:j + L, :]
        return m / MOVING_AVG

    def ffn(v_in):
        vf = v_in.reshape(Bn * L, D).astype(jnp.bfloat16)
        hh = jnp.maximum(jnp.dot(vf, p["w1"], preferred_element_type=jnp.float32), 0.0)
        return jnp.dot(hh.astype(jnp.bfloat16), p["w2"],
                       preferred_element_type=jnp.float32).reshape(Bn, L, D)

    xa = x + attention(x)
    xd = xa - moving_mean(xa)
    z = xd + ffn(xd)
    return z - moving_mean(z)


# ----------------------- PyTorch-layout parameters + host-side preparation ------------------------
def _uniform(key, shape, bound):
    return jax.random.uniform(key, shape, jnp.float32, -bound, bound)


def init_torch_params(key):
    """Parameters in their PyTorch layouts (Linear: (out, in); Conv1d k=1: (out, in, 1))."""
    D, F = D_MODEL, D_FF
    ks = jax.random.split(key, 10)
    bd, bf = 1.0 / math.sqrt(D), 1.0 / math.sqrt(F)
    return {
        "q_w": _uniform(ks[0], (D, D), bd), "q_b": _uniform(ks[1], (D,), bd),
        "k_w": _uniform(ks[2], (D, D), bd), "k_b": _uniform(ks[3], (D,), bd),
        "v_w": _uniform(ks[4], (D, D), bd), "v_b": _uniform(ks[5], (D,), bd),
        "o_w": _uniform(ks[6], (D, D), bd), "o_b": _uniform(ks[7], (D,), bd),
        "conv1_w": _uniform(ks[8], (F, D, 1), bd),   # Conv1d(d_model, d_ff, 1, bias=False)
        "conv2_w": _uniform(ks[9], (D, F, 1), bf),   # Conv1d(d_ff, d_model, 1, bias=False)
    }


def _banded_avg_matrix(L, k):
    """(L, L) moving-average operator with replicate padding + 1/k baked into the rows."""
    pad = (k - 1) // 2
    a = np.zeros((L, L), np.float32)
    for i in range(L):
        for j in range(i - pad, i + pad + 1):
            a[i, min(max(j, 0), L - 1)] += 1.0 / k
    return a


def prepare_params(tp):
    """Host-side layout plumbing: pre-transpose every weight (kernel does dot(x, w) with no .T),
    fuse the Q|K|V projections into one (D, 3D) weight + (1, 3D) bias, cast MXU operands to
    bf16, and build the block-diagonal banded averaging matrix for both series decompositions."""
    D = D_MODEL
    t = lambda w: jnp.asarray(w.T, dtype=jnp.bfloat16)
    wqkv = jnp.concatenate([t(tp["q_w"]), t(tp["k_w"]), t(tp["v_w"])], axis=1)   # (D, 3D) bf16
    bqkv = jnp.concatenate([tp["q_b"], tp["k_b"], tp["v_b"]]).reshape(1, 3 * D)  # (1, 3D) f32
    avg = jnp.asarray(np.kron(np.eye(B, dtype=np.float32),
                              _banded_avg_matrix(L_SEQ, MOVING_AVG)))            # (B*L, B*L) f32
    return {
        "wqkv": wqkv, "bqkv": bqkv,
        "wo": t(tp["o_w"]), "bo": tp["o_b"].reshape(1, D),
        "w1": t(tp["conv1_w"][:, :, 0]),             # (d_model, d_ff) bf16
        "w2": t(tp["conv2_w"][:, :, 0]),             # (d_ff, d_model) bf16
        "avg": avg,
    }


# --------------------------------------------- main -----------------------------------------------
if __name__ == "__main__":
    key = jax.random.PRNGKey(0)
    k_x, k_p = jax.random.split(key)
    x = jax.random.normal(k_x, (B, L_SEQ, D_MODEL), jnp.float32)
    params = prepare_params(init_torch_params(k_p))

    out = jax.block_until_ready(encoder_layer_pallas(x, params))
    ref = encoder_layer_ref(x, params)

    assert out.shape == (B, L_SEQ, D_MODEL)
    # Tolerance covers bf16 MXU operands + approx EUP reciprocal vs the exact-f32 moving-average
    # reference formulation.
    assert bool(jnp.allclose(out, ref, atol=3e-2, rtol=3e-2)), \
        float(jnp.max(jnp.abs(out - ref)))
    print("KERNEL_OK")
</pallas_src>

<mosaic_0001>
module attributes {stable_mosaic.version = 11 : i64} {
  func.func @_encoder_layer_kernel(%arg0: i32, %arg1: memref<32x32xf32, #tpu.memory_space<vmem>>, %arg2: memref<32x96xbf16, #tpu.memory_space<vmem>>, %arg3: memref<1x96xf32, #tpu.memory_space<vmem>>, %arg4: memref<32x32xbf16, #tpu.memory_space<vmem>>, %arg5: memref<1x32xf32, #tpu.memory_space<vmem>>, %arg6: memref<32x64xbf16, #tpu.memory_space<vmem>>, %arg7: memref<64x32xbf16, #tpu.memory_space<vmem>>, %arg8: memref<32x32xf32, #tpu.memory_space<vmem>>, %arg9: memref<32x32xf32, #tpu.memory_space<vmem>>) attributes {dimension_semantics = [#tpu.dimension_semantics<parallel>], iteration_bounds = array<i64: 1>, scalar_prefetch = 0 : i64, scratch_operands = 0 : i64, tpu.core_type = #tpu.core_type<tc>, window_params = [{transform_indices = @transform_0, window_bounds = array<i64: 32, 32>}, {pipeline_mode = #tpu.pipeline_mode<synchronous>, transform_indices = @transform_1, window_bounds = array<i64: 32, 96>}, {pipeline_mode = #tpu.pipeline_mode<synchronous>, transform_indices = @transform_2, window_bounds = array<i64: 1, 96>}, {pipeline_mode = #tpu.pipeline_mode<synchronous>, transform_indices = @transform_3, window_bounds = array<i64: 32, 32>}, {pipeline_mode = #tpu.pipeline_mode<synchronous>, transform_indices = @transform_4, window_bounds = array<i64: 1, 32>}, {pipeline_mode = #tpu.pipeline_mode<synchronous>, transform_indices = @transform_5, window_bounds = array<i64: 32, 64>}, {pipeline_mode = #tpu.pipeline_mode<synchronous>, transform_indices = @transform_6, window_bounds = array<i64: 64, 32>}, {transform_indices = @transform_7, window_bounds = array<i64: 32, 32>}, {transform_indices = @transform_8, window_bounds = array<i64: 32, 32>}]} {
    %c0 = arith.constant 0 : index
    %c0_0 = arith.constant 0 : index
    %0 = vector.load %arg1[%c0, %c0_0] : memref<32x32xf32, #tpu.memory_space<vmem>>, vector<32x32xf32>
    %c0_1 = arith.constant 0 : index
    %c0_2 = arith.constant 0 : index
    %1 = vector.load %arg8[%c0_1, %c0_2] : memref<32x32xf32, #tpu.memory_space<vmem>>, vector<32x32xf32>
    %2 = arith.truncf %0 : vector<32x32xf32> to vector<32x32xbf16>
    %c0_3 = arith.constant 0 : index
    %c0_4 = arith.constant 0 : index
    %3 = vector.load %arg2[%c0_3, %c0_4] : memref<32x96xbf16, #tpu.memory_space<vmem>>, vector<32x96xbf16>
    %cst = arith.constant dense<0.000000e+00> : vector<32x96xf32>
    %4 = tpu.matmul %2, %3, %cst {dimension_numbers = #tpu.dot_dimension_numbers<[1], [0], [0], [1], [0, 0, 1, 1], [], []>} : vector<32x32xbf16>, vector<32x96xbf16>, vector<32x96xf32> -> vector<32x96xf32>
    %c0_5 = arith.constant 0 : index
    %c0_6 = arith.constant 0 : index
    %5 = vector.load %arg3[%c0_5, %c0_6] : memref<1x96xf32, #tpu.memory_space<vmem>>, vector<1x96xf32>
    %6 = vector.broadcast %5 : vector<1x96xf32> to vector<32x96xf32>
    %7 = arith.addf %4, %6 : vector<32x96xf32>
    %8 = vector.extract_strided_slice %7 {offsets = [0, 0], sizes = [32, 8], strides = [1, 1]} : vector<32x96xf32> to vector<32x8xf32>
    %9 = vector.shape_cast %8 : vector<32x8xf32> to vector<2x16x8xf32>
    %10 = vector.extract_strided_slice %7 {offsets = [0, 8], sizes = [32, 8], strides = [1, 1]} : vector<32x96xf32> to vector<32x8xf32>
    %11 = vector.shape_cast %10 : vector<32x8xf32> to vector<2x16x8xf32>
    %12 = vector.extract_strided_slice %7 {offsets = [0, 16], sizes = [32, 8], strides = [1, 1]} : vector<32x96xf32> to vector<32x8xf32>
    %13 = vector.shape_cast %12 : vector<32x8xf32> to vector<2x16x8xf32>
    %14 = vector.extract_strided_slice %7 {offsets = [0, 24], sizes = [32, 8], strides = [1, 1]} : vector<32x96xf32> to vector<32x8xf32>
    %15 = vector.shape_cast %14 : vector<32x8xf32> to vector<2x16x8xf32>
    %16 = tpu.concatenate %9, %11, %13, %15 in 0 : vector<2x16x8xf32>, vector<2x16x8xf32>, vector<2x16x8xf32>, vector<2x16x8xf32> -> vector<8x16x8xf32>
    %17 = arith.truncf %16 : vector<8x16x8xf32> to vector<8x16x8xbf16>
    %18 = vector.extract_strided_slice %7 {offsets = [0, 32], sizes = [32, 8], strides = [1, 1]} : vector<32x96xf32> to vector<32x8xf32>
    %19 = vector.shape_cast %18 : vector<32x8xf32> to vector<2x16x8xf32>
    %20 = vector.extract_strided_slice %7 {offsets = [0, 40], sizes = [32, 8], strides = [1, 1]} : vector<32x96xf32> to vector<32x8xf32>
    %21 = vector.shape_cast %20 : vector<32x8xf32> to vector<2x16x8xf32>
    %22 = vector.extract_strided_slice %7 {offsets = [0, 48], sizes = [32, 8], strides = [1, 1]} : vector<32x96xf32> to vector<32x8xf32>
    %23 = vector.shape_cast %22 : vector<32x8xf32> to vector<2x16x8xf32>
    %24 = vector.extract_strided_slice %7 {offsets = [0, 56], sizes = [32, 8], strides = [1, 1]} : vector<32x96xf32> to vector<32x8xf32>
    %25 = vector.shape_cast %24 : vector<32x8xf32> to vector<2x16x8xf32>
    %26 = tpu.concatenate %19, %21, %23, %25 in 0 : vector<2x16x8xf32>, vector<2x16x8xf32>, vector<2x16x8xf32>, vector<2x16x8xf32> -> vector<8x16x8xf32>
    %27 = arith.truncf %26 : vector<8x16x8xf32> to vector<8x16x8xbf16>
    %28 = vector.extract_strided_slice %7 {offsets = [0, 64], sizes = [32, 8], strides = [1, 1]} : vector<32x96xf32> to vector<32x8xf32>
    %29 = vector.shape_cast %28 : vector<32x8xf32> to vector<2x16x8xf32>
    %30 = vector.extract_strided_slice %7 {offsets = [0, 72], sizes = [32, 8], strides = [1, 1]} : vector<32x96xf32> to vector<32x8xf32>
    %31 = vector.shape_cast %30 : vector<32x8xf32> to vector<2x16x8xf32>
    %32 = vector.extract_strided_slice %7 {offsets = [0, 80], sizes = [32, 8], strides = [1, 1]} : vector<32x96xf32> to vector<32x8xf32>
    %33 = vector.shape_cast %32 : vector<32x8xf32> to vector<2x16x8xf32>
    %34 = vector.extract_strided_slice %7 {offsets = [0, 88], sizes = [32, 8], strides = [1, 1]} : vector<32x96xf32> to vector<32x8xf32>
    %35 = vector.shape_cast %34 : vector<32x8xf32> to vector<2x16x8xf32>
    %36 = tpu.concatenate %29, %31, %33, %35 in 0 : vector<2x16x8xf32>, vector<2x16x8xf32>, vector<2x16x8xf32>, vector<2x16x8xf32> -> vector<8x16x8xf32>
    %37 = arith.truncf %36 : vector<8x16x8xf32> to vector<8x16x8xbf16>
    "tpu.trace_start"() <{level = 10 : i32, message = "nqe,nke->nqk"}> : () -> ()
    %cst_7 = arith.constant dense<0.000000e+00> : vector<8x16x16xf32>
    %38 = tpu.matmul %17, %27, %cst_7 {dimension_numbers = #tpu.dot_dimension_numbers<[2], [2], [1], [1], [0, 0, 0, 1, 1, 1], [0], [0]>} : vector<8x16x8xbf16>, vector<8x16x8xbf16>, vector<8x16x16xf32> -> vector<8x16x16xf32>
    "tpu.trace_stop"() : () -> ()
    %cst_8 = arith.constant 0.353553385 : f32
    %39 = vector.broadcast %cst_8 : f32 to vector<8x16x16xf32>
    %40 = arith.mulf %38, %39 : vector<8x16x16xf32>
    %cst_9 = arith.constant dense<0xFF800000> : vector<8x16xf32>
    %41 = vector.multi_reduction <maximumf>, %40, %cst_9 [2] : vector<8x16x16xf32> to vector<8x16xf32>
    %42 = vector.shape_cast %41 : vector<8x16xf32> to vector<8x16x1xf32>
    %43 = vector.broadcast %42 : vector<8x16x1xf32> to vector<8x16x16xf32>
    %44 = arith.subf %40, %43 : vector<8x16x16xf32>
    %45 = math.exp %44 : vector<8x16x16xf32>
    %cst_10 = arith.constant dense<0.000000e+00> : vector<8x16xf32>
    %46 = vector.multi_reduction <add>, %45, %cst_10 [2] : vector<8x16x16xf32> to vector<8x16xf32>
    %47 = vector.shape_cast %46 : vector<8x16xf32> to vector<8x16x1xf32>
    %48 = tpu.reciprocal %47 {approx = true} : vector<8x16x1xf32> -> vector<8x16x1xf32>
    %49 = vector.broadcast %48 : vector<8x16x1xf32> to vector<8x16x16xf32>
    %50 = arith.mulf %45, %49 : vector<8x16x16xf32>
    %51 = arith.truncf %50 : vector<8x16x16xf32> to vector<8x16x16xbf16>
    "tpu.trace_start"() <{level = 10 : i32, message = "nqk,nke->nqe"}> : () -> ()
    %cst_11 = arith.constant dense<0.000000e+00> : vector<8x16x8xf32>
    %52 = tpu.matmul %51, %37, %cst_11 {dimension_numbers = #tpu.dot_dimension_numbers<[2], [1], [1], [2], [0, 0, 0, 1, 1, 2], [0], [0]>} : vector<8x16x16xbf16>, vector<8x16x8xbf16>, vector<8x16x8xf32> -> vector<8x16x8xf32>
    "tpu.trace_stop"() : () -> ()
    %53 = vector.extract_strided_slice %52 {offsets = [0, 0, 0], sizes = [2, 16, 8], strides = [1, 1, 1]} : vector<8x16x8xf32> to vector<2x16x8xf32>
    %54 = vector.shape_cast %53 : vector<2x16x8xf32> to vector<32x8xf32>
    %55 = vector.extract_strided_slice %52 {offsets = [2, 0, 0], sizes = [2, 16, 8], strides = [1, 1, 1]} : vector<8x16x8xf32> to vector<2x16x8xf32>
    %56 = vector.shape_cast %55 : vector<2x16x8xf32> to vector<32x8xf32>
    %57 = vector.extract_strided_slice %52 {offsets = [4, 0, 0], sizes = [2, 16, 8], strides = [1, 1, 1]} : vector<8x16x8xf32> to vector<2x16x8xf32>
    %58 = vector.shape_cast %57 : vector<2x16x8xf32> to vector<32x8xf32>
    %59 = vector.extract_strided_slice %52 {offsets = [6, 0, 0], sizes = [2, 16, 8], strides = [1, 1, 1]} : vector<8x16x8xf32> to vector<2x16x8xf32>
    %60 = vector.shape_cast %59 : vector<2x16x8xf32> to vector<32x8xf32>
    %61 = tpu.concatenate %54, %56, %58, %60 in 1 : vector<32x8xf32>, vector<32x8xf32>, vector<32x8xf32>, vector<32x8xf32> -> vector<32x32xf32>
    %62 = arith.truncf %61 : vector<32x32xf32> to vector<32x32xbf16>
    %c0_12 = arith.constant 0 : index
    %c0_13 = arith.constant 0 : index
    %63 = vector.load %arg4[%c0_12, %c0_13] : memref<32x32xbf16, #tpu.memory_space<vmem>>, vector<32x32xbf16>
    %cst_14 = arith.constant dense<0.000000e+00> : vector<32x32xf32>
    %64 = tpu.matmul %62, %63, %cst_14 {dimension_numbers = #tpu.dot_dimension_numbers<[1], [0], [0], [1], [0, 0, 1, 1], [], []>} : vector<32x32xbf16>, vector<32x32xbf16>, vector<32x32xf32> -> vector<32x32xf32>
    %c0_15 = arith.constant 0 : index
    %c0_16 = arith.constant 0 : index
    %65 = vector.load %arg5[%c0_15, %c0_16] : memref<1x32xf32, #tpu.memory_space<vmem>>, vector<1x32xf32>
    %66 = vector.broadcast %65 : vector<1x32xf32> to vector<32x32xf32>
    %67 = arith.addf %64, %66 : vector<32x32xf32>
    %68 = arith.addf %0, %67 : vector<32x32xf32>
    %cst_17 = arith.constant dense<0.000000e+00> : vector<32x32xf32>
    %69 = tpu.matmul %1, %68, %cst_17 {dimension_numbers = #tpu.dot_dimension_numbers<[1], [0], [0], [1], [0, 0, 1, 1], [], []>} : vector<32x32xf32>, vector<32x32xf32>, vector<32x32xf32> -> vector<32x32xf32>
    %70 = arith.subf %68, %69 : vector<32x32xf32>
    %71 = arith.truncf %70 : vector<32x32xf32> to vector<32x32xbf16>
    %c0_18 = arith.constant 0 : index
    %c0_19 = arith.constant 0 : index
    %72 = vector.load %arg6[%c0_18, %c0_19] : memref<32x64xbf16, #tpu.memory_space<vmem>>, vector<32x64xbf16>
    %cst_20 = arith.constant dense<0.000000e+00> : vector<32x64xf32>
    %73 = tpu.matmul %71, %72, %cst_20 {dimension_numbers = #tpu.dot_dimension_numbers<[1], [0], [0], [1], [0, 0, 1, 1], [], []>} : vector<32x32xbf16>, vector<32x64xbf16>, vector<32x64xf32> -> vector<32x64xf32>
    %cst_21 = arith.constant 0.000000e+00 : f32
    %74 = vector.broadcast %cst_21 : f32 to vector<32x64xf32>
    %75 = arith.maximumf %73, %74 : vector<32x64xf32>
    %76 = arith.truncf %75 : vector<32x64xf32> to vector<32x64xbf16>
    %c0_22 = arith.constant 0 : index
    %c0_23 = arith.constant 0 : index
    %77 = vector.load %arg7[%c0_22, %c0_23] : memref<64x32xbf16, #tpu.memory_space<vmem>>, vector<64x32xbf16>
    %cst_24 = arith.constant dense<0.000000e+00> : vector<32x32xf32>
    %78 = tpu.matmul %76, %77, %cst_24 {dimension_numbers = #tpu.dot_dimension_numbers<[1], [0], [0], [1], [0, 0, 1, 1], [], []>} : vector<32x64xbf16>, vector<64x32xbf16>, vector<32x32xf32> -> vector<32x32xf32>
    %79 = arith.addf %70, %78 : vector<32x32xf32>
    %cst_25 = arith.constant dense<0.000000e+00> : vector<32x32xf32>
    %80 = tpu.matmul %1, %79, %cst_25 {dimension_numbers = #tpu.dot_dimension_numbers<[1], [0], [0], [1], [0, 0, 1, 1], [], []>} : vector<32x32xf32>, vector<32x32xf32>, vector<32x32xf32> -> vector<32x32xf32>
    %81 = arith.subf %79, %80 : vector<32x32xf32>
    %c0_26 = arith.constant 0 : index
    %c0_27 = arith.constant 0 : index
    %82 = vector.load %arg9[%c0_26, %c0_27] : memref<32x32xf32, #tpu.memory_space<vmem>>, vector<32x32xf32>
    tpu.vector_store %arg9[%c0_26, %c0_27], %81 {strides = array<i32>} : memref<32x32xf32, #tpu.memory_space<vmem>>, vector<32x32xf32>,
    return
  }
  func.func @transform_0(%arg0: i32) -> (i32, i32) {
    %c0_i32 = arith.constant 0 : i32
    %c0_i32_0 = arith.constant 0 : i32
    return %arg0, %c0_i32 : i32, i32
  }
  func.func @transform_1(%arg0: i32) -> (i32, i32) {
    %c0_i32 = arith.constant 0 : i32
    %c0_i32_0 = arith.constant 0 : i32
    %c0_i32_1 = arith.constant 0 : i32
    return %c0_i32, %c0_i32_0 : i32, i32
  }
  func.func @transform_2(%arg0: i32) -> (i32, i32) {
    %c0_i32 = arith.constant 0 : i32
    %c0_i32_0 = arith.constant 0 : i32
    %c0_i32_1 = arith.constant 0 : i32
    return %c0_i32, %c0_i32_0 : i32, i32
  }
  func.func @transform_3(%arg0: i32) -> (i32, i32) {
    %c0_i32 = arith.constant 0 : i32
    %c0_i32_0 = arith.constant 0 : i32
    %c0_i32_1 = arith.constant 0 : i32
    return %c0_i32, %c0_i32_0 : i32, i32
  }
  func.func @transform_4(%arg0: i32) -> (i32, i32) {
    %c0_i32 = arith.constant 0 : i32
    %c0_i32_0 = arith.constant 0 : i32
    %c0_i32_1 = arith.constant 0 : i32
    return %c0_i32, %c0_i32_0 : i32, i32
  }
  func.func @transform_5(%arg0: i32) -> (i32, i32) {
    %c0_i32 = arith.constant 0 : i32
    %c0_i32_0 = arith.constant 0 : i32
    %c0_i32_1 = arith.constant 0 : i32
    return %c0_i32, %c0_i32_0 : i32, i32
  }
  func.func @transform_6(%arg0: i32) -> (i32, i32) {
    %c0_i32 = arith.constant 0 : i32
    %c0_i32_0 = arith.constant 0 : i32
    %c0_i32_1 = arith.constant 0 : i32
    return %c0_i32, %c0_i32_0 : i32, i32
  }
  func.func @transform_7(%arg0: i32) -> (i32, i32) {
    %c0_i32 = arith.constant 0 : i32
    return %arg0, %arg0 : i32, i32
  }
  func.func @transform_8(%arg0: i32) -> (i32, i32) {
    %c0_i32 = arith.constant 0 : i32
    %c0_i32_0 = arith.constant 0 : i32
    return %arg0, %c0_i32 : i32, i32
  }
}

</mosaic_0001>

<llo_original>
// kernel: tpu_custom_call.1
$region0: #{tpu_custom_call.1}
  #allocation0 [shape = 'u32[]', space=smem, size = 0x4, offset = 0x4, fixed_abs, tag = 'smem constant byte address 0x4 - core index']
  #allocation1 [shape = 'u32[72,128]{1,0:T(1,128)}', space=vmem, size = 0x9000, scoped, tag = 'internal scratch']
  %s0 = inlined_call_operand.vmem [shape: f32[32,32], index: 0, kind: input, shape index: {}]
  %s1 = inlined_call_operand.vmem [shape: bf16[32,96], index: 1, kind: input, shape index: {}]
  %s2 = inlined_call_operand.vmem [shape: f32[1,96], index: 2, kind: input, shape index: {}]
  %s3 = inlined_call_operand.hbm [shape: bf16[32,32], index: 3, kind: input, shape index: {}]
  %s4 = inlined_call_operand.vmem [shape: f32[1,32], index: 4, kind: input, shape index: {}]
  %s5 = inlined_call_operand.hbm [shape: bf16[32,64], index: 5, kind: input, shape index: {}]
  %s6 = inlined_call_operand.vmem [shape: bf16[64,32], index: 6, kind: input, shape index: {}]
  %s7 = inlined_call_operand.hbm [shape: f32[32,32], index: 7, kind: input, shape index: {}]
  %s8 = inlined_call_operand.hbm [shape: f32[32,32], index: 8, kind: output, shape index: {}]
  %s9 = sld [smem:[#allocation0]]
  $region54: #{tpu_custom_call.1} parent=0
    _
  %s11 = ssub.s32 1, %s9
  %s12 = scalar_select 0, %s11, %s9
  $region1: #{tpu_custom_call.1} parent=0
    #allocation2 [shape = 'u8[8192]{0}', space=vmem, size = 0x2000, scoped, tag = 'input window, operand 3, single buffered']
    #allocation3 [shape = 's32[1]{0}', space=sflag, size = 0x4, scoped, tag = 'scoped memory for tpu_custom_call.1']
    #allocation4 [shape = 's32[1]{0}', space=sflag, size = 0x4, scoped, tag = 'scoped memory for tpu_custom_call.1']
    #allocation5 [shape = 'u8[8192]{0}', space=vmem, size = 0x2000, scoped, tag = 'input window, operand 5, single buffered']
    #allocation6 [shape = 's32[1]{0}', space=sflag, size = 0x4, scoped, tag = 'scoped memory for tpu_custom_call.1']
    #allocation7 [shape = 'u8[16384]{0}', space=vmem, size = 0x4000, scoped, tag = 'input window, operand 7, single buffered']
    #allocation8 [shape = 'u8[16384]{0}', space=vmem, size = 0x4000, scoped, tag = 'output window, operand 0, single buffered']
    %13 = vsyncpa [#allocation3], 0
    %14 = vsyncpa [#allocation6], 0
    %15 = vsyncpa [#allocation4], 0
    // Predicated region
    $region2: #{tpu_custom_call.1} parent=1 // pred_check
      _
    $region3: #{tpu_custom_call.1} parent=1 // pred_check_branch
      %17 = sbr.rel (0) target = $region5
    $region4: #{tpu_custom_call.1} parent=1 // pred_region
      _
    $region5: #{tpu_custom_call.1} parent=1 // pred_fallthru
      _
    // Predicated region
    $region6: #{tpu_custom_call.1} parent=1 // pred_check
      _
    $region7: #{tpu_custom_call.1} parent=1 // pred_check_branch
      %19 = sbr.rel (0) target = $region9
    $region8: #{tpu_custom_call.1} parent=1 // pred_region
      _
    $region9: #{tpu_custom_call.1} parent=1 // pred_fallthru
      _
    // Predicated region
    $region10: #{tpu_custom_call.1} parent=1 // pred_check
      _
    $region11: #{tpu_custom_call.1} parent=1 // pred_check_branch
      %21 = sbr.rel (0) target = $region13
    $region12: #{tpu_custom_call.1} parent=1 // pred_region
      _
    $region13: #{tpu_custom_call.1} parent=1 // pred_fallthru
      _
    // Predicated region
    $region14: #{tpu_custom_call.1} parent=1 // pred_check
      _
    $region15: #{tpu_custom_call.1} parent=1 // pred_check_branch
      %23 = sbr.rel (0) target = $region17
    $region16: #{tpu_custom_call.1} parent=1 // pred_region
      %25 = vsyncadd [#allocation3], 0
      %s26 = sshll.u32 %s3, 4
      %s27 = int_to_ptr.hbm [resolvable:$true] %s26
      %s28 = sshll.u32 [#allocation2], 4
      %s29 = int_to_ptr.vmem [resolvable:$true] %s28
      %34 = dma.hbm_to_vmem [thread:$0]  %s27, 256, %s29, [#allocation3], 64, 64, 4
    $region17: #{tpu_custom_call.1} parent=1 // pred_fallthru
      _
    // Predicated region
    $region18: #{tpu_custom_call.1} parent=1 // pred_check
      _
    $region19: #{tpu_custom_call.1} parent=1 // pred_check_branch
      %36 = sbr.rel (0) target = $region21
    $region20: #{tpu_custom_call.1} parent=1 // pred_region
      _
    $region21: #{tpu_custom_call.1} parent=1 // pred_fallthru
      _
    // Predicated region
    $region22: #{tpu_custom_call.1} parent=1 // pred_check
      _
    $region23: #{tpu_custom_call.1} parent=1 // pred_check_branch
      %38 = sbr.rel (0) target = $region25
    $region24: #{tpu_custom_call.1} parent=1 // pred_region
      %40 = vsyncadd [#allocation6], 0
      %s41 = sshll.u32 %s5, 4
      %s42 = int_to_ptr.hbm [resolvable:$true] %s41
      %s43 = sshll.u32 [#allocation5], 4
      %s44 = int_to_ptr.vmem [resolvable:$true] %s43
      %49 = dma.hbm_to_vmem [thread:$0]  %s42, 256, %s44, [#allocation6], 64, 64, 4
    $region25: #{tpu_custom_call.1} parent=1 // pred_fallthru
      _
    // Predicated region
    $region26: #{tpu_custom_call.1} parent=1 // pred_check
      _
    $region27: #{tpu_custom_call.1} parent=1 // pred_check_branch
      %51 = sbr.rel (0) target = $region29
    $region28: #{tpu_custom_call.1} parent=1 // pred_region
      _
    $region29: #{tpu_custom_call.1} parent=1 // pred_fallthru
      _
    // Predicated region
    $region30: #{tpu_custom_call.1} parent=1 // pred_check
      _
    $region31: #{tpu_custom_call.1} parent=1 // pred_check_branch
      %53 = sbr.rel (0) target = $region33
    $region32: #{tpu_custom_call.1} parent=1 // pred_region
      %55 = vsyncadd [#allocation6], 0
      %s56 = sshll.u32 %s7, 4
      %s57 = int_to_ptr.hbm [resolvable:$true] %s56
      %s58 = sshll.u32 [#allocation7], 4
      %s59 = int_to_ptr.vmem [resolvable:$true] %s58
      %64 = dma.hbm_to_vmem [thread:$0]  %s57, 512, %s59, [#allocation6], 128, 128, 8
    $region33: #{tpu_custom_call.1} parent=1 // pred_fallthru
      _
    // Predicated region
    $region34: #{tpu_custom_call.1} parent=1 // pred_check
      _
    $region35: #{tpu_custom_call.1} parent=1 // pred_check_branch
      %66 = sbr.rel (0) target = $region37
    $region36: #{tpu_custom_call.1} parent=1 // pred_region
      %68 = dma.done [#allocation3], 256
    $region37: #{tpu_custom_call.1} parent=1 // pred_fallthru
      _
    // Predicated region
    $region38: #{tpu_custom_call.1} parent=1 // pred_check
      _
    $region39: #{tpu_custom_call.1} parent=1 // pred_check_branch
      %70 = sbr.rel (0) target = $region41
    $region40: #{tpu_custom_call.1} parent=1 // pred_region
      %72 = dma.done [#allocation6], 256
    $region41: #{tpu_custom_call.1} parent=1 // pred_fallthru
      _
    // Predicated region
    $region42: #{tpu_custom_call.1} parent=1 // pred_check
      _
    $region43: #{tpu_custom_call.1} parent=1 // pred_check_branch
      %74 = sbr.rel (0) target = $region45
    $region44: #{tpu_custom_call.1} parent=1 // pred_region
      %76 = dma.done [#allocation6], 512
    $region45: #{tpu_custom_call.1} parent=1 // pred_fallthru
      _
    %v78 = vld [vmem:[%s0] sm:$0xff]
    %v79 = vld [vmem:[%s0 + $0x8] sm:$0xff]
    %v80 = vld [vmem:[%s0 + $0x10] sm:$0xff]
    %v81 = vld [vmem:[%s0 + $0x18] sm:$0xff]
    %v82 = vld [vmem:[#allocation7] sm:$0xff]
    %v83 = vld [vmem:[#allocation7 + $0x8] sm:$0xff]
    %v84 = vld [vmem:[#allocation7 + $0x10] sm:$0xff]
    %v85 = vld [vmem:[#allocation7 + $0x18] sm:$0xff]
    %v86 = vpack.c.bf16 %v79, %v78
    %v87 = vpack.c.bf16 %v81, %v80
    %v88 = vld [vmem:[%s1] sm:$0xf]
    %v89 = vld [vmem:[%s1 + $0x4] sm:$0xf]
    %v90 = vld [vmem:[%s1 + $0x8] sm:$0xf]
    %v91 = vld [vmem:[%s1 + $0xc] sm:$0xf]
    %v92 = vld [vmem:[%s2] sm:$0x1]
    %v94 = vperm.slane %v92, 0
    %v100 = vunpack.c.l.b16 %v88
    %v101 = vunpack.c.l.b16 %v89
    %v102 = vunpack.c.l.b16 %v90
    %v103 = vunpack.c.l.b16 %v91
    %v104 = vpack.c.b16 %v101, %v100
    %v105 = vpack.c.b16 %v103, %v102
    %vm108 = vcmask 261120
    %v110 = vsel %vm108, %v86, 0
    %v113 = vsel %vm108, %v87, 0
    %115 = vmatpush.bf16.msra.mxu0 0
    %116 = vmatpush.bf16.msra.mxu0 0
    %117 = vmatpush.bf16.msra.mxu0 0
    %118 = vmatpush.bf16.msra.mxu0 0
    %119 = vmatpush.bf16.msra.mxu0 0
    %120 = vmatpush.bf16.msra.mxu0 0
    %121 = vmatpush.bf16.msra.mxu0 %v105
    %122 = vmatpush.bf16.msra.mxu0 %v104
    %123 = vmatmul.bf16.gmra.mxu0 %v110
    %v124 = vpop.f32.mrf.mxu0
    %v125 = vadd.f32 %v94, %v124
    %v126 = vpop.f32.mrf.mxu0
    %v127 = vadd.f32 %v94, %v126
    %128 = vmatmul.bf16.gmra.mxu0 %v113
    %v129 = vpop.f32.mrf.mxu0
    %v130 = vadd.f32 %v94, %v129
    %v131 = vpop.f32.mrf.mxu0
    %v132 = vadd.f32 %v94, %v131
    %133 = vdwg.mxu0
    %138 = vrot.lane.b32.xlu0 %v125, 120
    %v139 = vpop.permute.xlu0 %138
    %140 = vrot.lane.b32.xlu0 %v127, 120
    %v141 = vpop.permute.xlu0 %140
    %142 = vrot.lane.b32.xlu0 %v130, 120
    %v143 = vpop.permute.xlu0 %142
    %144 = vrot.lane.b32.xlu0 %v132, 120
    %v145 = vpop.permute.xlu0 %144
    %150 = vrot.lane.b32.xlu0 %v125, 112
    %v151 = vpop.permute.xlu0 %150
    %152 = vrot.lane.b32.xlu0 %v127, 112
    %v153 = vpop.permute.xlu0 %152
    %154 = vrot.lane.b32.xlu0 %v130, 112
    %v155 = vpop.permute.xlu0 %154
    %156 = vrot.lane.b32.xlu0 %v132, 112
    %v157 = vpop.permute.xlu0 %156
    %162 = vrot.lane.b32.xlu0 %v125, 104
    %v163 = vpop.permute.xlu0 %162
    %164 = vrot.lane.b32.xlu0 %v127, 104
    %v165 = vpop.permute.xlu0 %164
    %166 = vrot.lane.b32.xlu0 %v130, 104
    %v167 = vpop.permute.xlu0 %166
    %168 = vrot.lane.b32.xlu0 %v132, 104
    %v169 = vpop.permute.xlu0 %168
    %v174 = vpack.c.bf16 %v125, %v125
    %v175 = vpack.c.bf16 %v127, %v127
    %v176 = vpack.c.bf16 %v130, %v130
    %v177 = vpack.c.bf16 %v132, %v132
    %v178 = vpack.c.bf16 %v139, %v139
    %v179 = vpack.c.bf16 %v141, %v141
    %v180 = vpack.c.bf16 %v143, %v143
    %v181 = vpack.c.bf16 %v145, %v145
    %v182 = vpack.c.bf16 %v151, %v151
    %v183 = vpack.c.bf16 %v153, %v153
    %v184 = vpack.c.bf16 %v155, %v155
    %v185 = vpack.c.bf16 %v157, %v157
    %v186 = vpack.c.bf16 %v163, %v163
    %v187 = vpack.c.bf16 %v165, %v165
    %v188 = vpack.c.bf16 %v167, %v167
    %v189 = vpack.c.bf16 %v169, %v169
    %v192 = vunpack.c.l.b16 %v174
    %v193 = vunpack.c.l.b16 %v175
    %v194 = vpack.c.b16 %v193, %v192
    %195 = vrot.lane.b32.xlu0 %v194, 96
    %v196 = vpop.permute.xlu0 %195
    %vm197 = vcmask 64512
    %v199 = vsel %vm197, %v194, 0
    %v202 = vsel %vm197, %v196, 0
    %204 = vmatpush.bf16.xpose.msra.mxu0 0
    %205 = vmatpush.bf16.xpose.msra.mxu0 0
    %206 = vmatpush.bf16.xpose.msra.mxu0 0
    %207 = vmatpush.bf16.xpose.msra.mxu0 0
    %208 = vmatpush.bf16.xpose.msra.mxu0 0
    %209 = vmatpush.bf16.xpose.msra.mxu0 0
    %210 = vmatpush.bf16.xpose.msra.mxu0 0
    %211 = vmatpush.bf16.xpose.msra.mxu0 %v202
    %212 = vmatmul.bf16.gmra.mxu0 %v199
    %v213 = vpop.f32.mrf.mxu0
    %v214 = vadd.f32 0.0, %v213
    %v215 = vpop.f32.mrf.mxu0
    %v216 = vadd.f32 0.0, %v215
    %217 = vdwg.mxu0
    %v220 = vunpack.c.l.b16 %v176
    %v221 = vunpack.c.l.b16 %v177
    %v222 = vpack.c.b16 %v221, %v220
    %223 = vrot.lane.b32.xlu0 %v222, 96
    %v224 = vpop.permute.xlu0 %223
    %v226 = vsel %vm197, %v222, 0
    %v229 = vsel %vm197, %v224, 0
    %231 = vmatpush.bf16.xpose.msra.mxu0 0
    %232 = vmatpush.bf16.xpose.msra.mxu0 0
    %233 = vmatpush.bf16.xpose.msra.mxu0 0
    %234 = vmatpush.bf16.xpose.msra.mxu0 0
    %235 = vmatpush.bf16.xpose.msra.mxu0 0
    %236 = vmatpush.bf16.xpose.msra.mxu0 0
    %237 = vmatpush.bf16.xpose.msra.mxu0 0
    %238 = vmatpush.bf16.xpose.msra.mxu0 %v229
    %239 = vmatmul.bf16.gmra.mxu0 %v226
    %v240 = vpop.f32.mrf.mxu0
    %v241 = vadd.f32 0.0, %v240
    %v242 = vpop.f32.mrf.mxu0
    %v243 = vadd.f32 0.0, %v242
    %244 = vdwg.mxu0
    %v247 = vunpack.c.l.b16 %v178
    %v248 = vunpack.c.l.b16 %v179
    %v249 = vpack.c.b16 %v248, %v247
    %250 = vrot.lane.b32.xlu0 %v249, 96
    %v251 = vpop.permute.xlu0 %250
    %v253 = vsel %vm197, %v249, 0
    %v256 = vsel %vm197, %v251, 0
    %258 = vmatpush.bf16.xpose.msra.mxu0 0
    %259 = vmatpush.bf16.xpose.msra.mxu0 0
    %260 = vmatpush.bf16.xpose.msra.mxu0 0
    %261 = vmatpush.bf16.xpose.msra.mxu0 0
    %262 = vmatpush.bf16.xpose.msra.mxu0 0
    %263 = vmatpush.bf16.xpose.msra.mxu0 0
    %264 = vmatpush.bf16.xpose.msra.mxu0 0
    %265 = vmatpush.bf16.xpose.msra.mxu0 %v256
    %266 = vmatmul.bf16.gmra.mxu0 %v253
    %v267 = vpop.f32.mrf.mxu0
    %v268 = vadd.f32 0.0, %v267
    %v269 = vpop.f32.mrf.mxu0
    %v270 = vadd.f32 0.0, %v269
    %271 = vdwg.mxu0
    %v274 = vunpack.c.l.b16 %v180
    %v275 = vunpack.c.l.b16 %v181
    %v276 = vpack.c.b16 %v275, %v274
    %277 = vrot.lane.b32.xlu0 %v276, 96
    %v278 = vpop.permute.xlu0 %277
    %v280 = vsel %vm197, %v276, 0
    %v283 = vsel %vm197, %v278, 0
    %285 = vmatpush.bf16.xpose.msra.mxu0 0
    %286 = vmatpush.bf16.xpose.msra.mxu0 0
    %287 = vmatpush.bf16.xpose.msra.mxu0 0
    %288 = vmatpush.bf16.xpose.msra.mxu0 0
    %289 = vmatpush.bf16.xpose.msra.mxu0 0
    %290 = vmatpush.bf16.xpose.msra.mxu0 0
    %291 = vmatpush.bf16.xpose.msra.mxu0 0
    %292 = vmatpush.bf16.xpose.msra.mxu0 %v283
    %293 = vmatmul.bf16.gmra.mxu0 %v280
    %v294 = vpop.f32.mrf.mxu0
    %v295 = vadd.f32 0.0, %v294
    %v296 = vpop.f32.mrf.mxu0
    %v297 = vadd.f32 0.0, %v296
    %298 = vdwg.mxu0
    %v301 = vunpack.c.l.b16 %v182
    %v302 = vunpack.c.l.b16 %v183
    %v303 = vpack.c.b16 %v302, %v301
    %304 = vrot.lane.b32.xlu0 %v303, 96
    %v305 = vpop.permute.xlu0 %304
    %v307 = vsel %vm197, %v303, 0
    %v310 = vsel %vm197, %v305, 0
    %312 = vmatpush.bf16.xpose.msra.mxu0 0
    %313 = vmatpush.bf16.xpose.msra.mxu0 0
    %314 = vmatpush.bf16.xpose.msra.mxu0 0
    %315 = vmatpush.bf16.xpose.msra.mxu0 0
    %316 = vmatpush.bf16.xpose.msra.mxu0 0
    %317 = vmatpush.bf16.xpose.msra.mxu0 0
    %318 = vmatpush.bf16.xpose.msra.mxu0 0
    %319 = vmatpush.bf16.xpose.msra.mxu0 %v310
    %320 = vmatmul.bf16.gmra.mxu0 %v307
    %v321 = vpop.f32.mrf.mxu0
    %v322 = vadd.f32 0.0, %v321
    %v323 = vpop.f32.mrf.mxu0
    %v324 = vadd.f32 0.0, %v323
    %325 = vdwg.mxu0
    %v328 = vunpack.c.l.b16 %v184
    %v329 = vunpack.c.l.b16 %v185
    %v330 = vpack.c.b16 %v329, %v328
    %331 = vrot.lane.b32.xlu0 %v330, 96
    %v332 = vpop.permute.xlu0 %331
    %v334 = vsel %vm197, %v330, 0
    %v337 = vsel %vm197, %v332, 0
    %339 = vmatpush.bf16.xpose.msra.mxu0 0
    %340 = vmatpush.bf16.xpose.msra.mxu0 0
    %341 = vmatpush.bf16.xpose.msra.mxu0 0
    %342 = vmatpush.bf16.xpose.msra.mxu0 0
    %343 = vmatpush.bf16.xpose.msra.mxu0 0
    %344 = vmatpush.bf16.xpose.msra.mxu0 0
    %345 = vmatpush.bf16.xpose.msra.mxu0 0
    %346 = vmatpush.bf16.xpose.msra.mxu0 %v337
    %347 = vmatmul.bf16.gmra.mxu0 %v334
    %v348 = vpop.f32.mrf.mxu0
    %v349 = vadd.f32 0.0, %v348
    %v350 = vpop.f32.mrf.mxu0
    %v351 = vadd.f32 0.0, %v350
    %352 = vdwg.mxu0
    %v355 = vunpack.c.l.b16 %v186
    %v356 = vunpack.c.l.b16 %v187
    %v357 = vpack.c.b16 %v356, %v355
    %358 = vrot.lane.b32.xlu0 %v357, 96
    %v359 = vpop.permute.xlu0 %358
    %v361 = vsel %vm197, %v357, 0
    %v364 = vsel %vm197, %v359, 0
    %366 = vmatpush.bf16.xpose.msra.mxu0 0
    %367 = vmatpush.bf16.xpose.msra.mxu0 0
    %368 = vmatpush.bf16.xpose.msra.mxu0 0
    %369 = vmatpush.bf16.xpose.msra.mxu0 0
    %370 = vmatpush.bf16.xpose.msra.mxu0 0
    %371 = vmatpush.bf16.xpose.msra.mxu0 0
    %372 = vmatpush.bf16.xpose.msra.mxu0 0
    %373 = vmatpush.bf16.xpose.msra.mxu0 %v364
    %374 = vmatmul.bf16.gmra.mxu0 %v361
    %v375 = vpop.f32.mrf.mxu0
    %v376 = vadd.f32 0.0, %v375
    %v377 = vpop.f32.mrf.mxu0
    %v378 = vadd.f32 0.0, %v377
    %379 = vdwg.mxu0
    %v382 = vunpack.c.l.b16 %v188
    %v383 = vunpack.c.l.b16 %v189
    %v384 = vpack.c.b16 %v383, %v382
    %385 = vrot.lane.b32.xlu0 %v384, 96
    %v386 = vpop.permute.xlu0 %385
    %v388 = vsel %vm197, %v384, 0
    %v391 = vsel %vm197, %v386, 0
    %393 = vmatpush.bf16.xpose.msra.mxu0 0
    %394 = vmatpush.bf16.xpose.msra.mxu0 0
    %395 = vmatpush.bf16.xpose.msra.mxu0 0
    %396 = vmatpush.bf16.xpose.msra.mxu0 0
    %397 = vmatpush.bf16.xpose.msra.mxu0 0
    %398 = vmatpush.bf16.xpose.msra.mxu0 0
    %399 = vmatpush.bf16.xpose.msra.mxu0 0
    %400 = vmatpush.bf16.xpose.msra.mxu0 %v391
    %401 = vmatmul.bf16.gmra.mxu0 %v388
    %v402 = vpop.f32.mrf.mxu0
    %v403 = vadd.f32 0.0, %v402
    %v404 = vpop.f32.mrf.mxu0
    %v405 = vadd.f32 0.0, %v404
    %406 = vdwg.mxu0
    %v407 = vmul.f32 %v214, 0.35355338
    %v408 = vmul.f32 %v216, 0.35355338
    %v409 = vmul.f32 %v241, 0.35355338
    %v410 = vmul.f32 %v243, 0.35355338
    %v411 = vmul.f32 %v268, 0.35355338
    %v412 = vmul.f32 %v270, 0.35355338
    %v413 = vmul.f32 %v295, 0.35355338
    %v414 = vmul.f32 %v297, 0.35355338
    %v415 = vmul.f32 %v322, 0.35355338
    %v416 = vmul.f32 %v324, 0.35355338
    %v417 = vmul.f32 %v349, 0.35355338
    %v418 = vmul.f32 %v351, 0.35355338
    %v419 = vmul.f32 %v376, 0.35355338
    %v420 = vmul.f32 %v378, 0.35355338
    %v421 = vmul.f32 %v403, 0.35355338
    %v422 = vmul.f32 %v405, 0.35355338
    %vm423 = vcmask 130048
    %v424 = vsel %vm423, %v407, -inf
    %425 = vmax.xlane.f32.xlu0 %v424
    %v426 = vpop.xlane.xlu0 %425
    %v427 = vsel %vm423, %v408, -inf
    %428 = vmax.xlane.f32.xlu0 %v427
    %v429 = vpop.xlane.xlu0 %428
    %v430 = vsel %vm423, %v409, -inf
    %431 = vmax.xlane.f32.xlu0 %v430
    %v432 = vpop.xlane.xlu0 %431
    %v433 = vsel %vm423, %v410, -inf
    %434 = vmax.xlane.f32.xlu0 %v433
    %v435 = vpop.xlane.xlu0 %434
    %v436 = vsel %vm423, %v411, -inf
    %437 = vmax.xlane.f32.xlu0 %v436
    %v438 = vpop.xlane.xlu0 %437
    %v439 = vsel %vm423, %v412, -inf
    %440 = vmax.xlane.f32.xlu0 %v439
    %v441 = vpop.xlane.xlu0 %440
    %v442 = vsel %vm423, %v413, -inf
    %443 = vmax.xlane.f32.xlu0 %v442
    %v444 = vpop.xlane.xlu0 %443
    %v445 = vsel %vm423, %v414, -inf
    %446 = vmax.xlane.f32.xlu0 %v445
    %v447 = vpop.xlane.xlu0 %446
    %v448 = vsel %vm423, %v415, -inf
    %449 = vmax.xlane.f32.xlu0 %v448
    %v450 = vpop.xlane.xlu0 %449
    %v451 = vsel %vm423, %v416, -inf
    %452 = vmax.xlane.f32.xlu0 %v451
    %v453 = vpop.xlane.xlu0 %452
    %v454 = vsel %vm423, %v417, -inf
    %455 = vmax.xlane.f32.xlu0 %v454
    %v456 = vpop.xlane.xlu0 %455
    %v457 = vsel %vm423, %v418, -inf
    %458 = vmax.xlane.f32.xlu0 %v457
    %v459 = vpop.xlane.xlu0 %458
    %v460 = vsel %vm423, %v419, -inf
    %461 = vmax.xlane.f32.xlu0 %v460
    %v462 = vpop.xlane.xlu0 %461
    %v463 = vsel %vm423, %v420, -inf
    %464 = vmax.xlane.f32.xlu0 %v463
    %v465 = vpop.xlane.xlu0 %464
    %v466 = vsel %vm423, %v421, -inf
    %467 = vmax.xlane.f32.xlu0 %v466
    %v468 = vpop.xlane.xlu0 %467
    %v469 = vsel %vm423, %v422, -inf
    %470 = vmax.xlane.f32.xlu0 %v469
    %v471 = vpop.xlane.xlu0 %470
    %v472 = vsub.f32 %v407, %v426
    %v473 = vsub.f32 %v408, %v429
    %v474 = vsub.f32 %v409, %v432
    %v475 = vsub.f32 %v410, %v435
    %v476 = vsub.f32 %v411, %v438
    %v477 = vsub.f32 %v412, %v441
    %v478 = vsub.f32 %v413, %v444
    %v479 = vsub.f32 %v414, %v447
    %v480 = vsub.f32 %v415, %v450
    %v481 = vsub.f32 %v416, %v453
    %v482 = vsub.f32 %v417, %v456
    %v483 = vsub.f32 %v418, %v459
    %v484 = vsub.f32 %v419, %v462
    %v485 = vsub.f32 %v420, %v465
    %v486 = vsub.f32 %v421, %v468
    %v487 = vsub.f32 %v422, %v471
    %v488 = vmul.f32 %v472, 1.442695
    %v489 = vpow.pop %v488
    %v490 = vmul.f32 %v473, 1.442695
    %v491 = vpow.pop %v490
    %v492 = vmul.f32 %v474, 1.442695
    %v493 = vpow.pop %v492
    %v494 = vmul.f32 %v475, 1.442695
    %v495 = vpow.pop %v494
    %v496 = vmul.f32 %v476, 1.442695
    %v497 = vpow.pop %v496
    %v498 = vmul.f32 %v477, 1.442695
    %v499 = vpow.pop %v498
    %v500 = vmul.f32 %v478, 1.442695
    %v501 = vpow.pop %v500
    %v502 = vmul.f32 %v479, 1.442695
    %v503 = vpow.pop %v502
    %v504 = vmul.f32 %v480, 1.442695
    %v505 = vpow.pop %v504
    %v506 = vmul.f32 %v481, 1.442695
    %v507 = vpow.pop %v506
    %v508 = vmul.f32 %v482, 1.442695
    %v509 = vpow.pop %v508
    %v510 = vmul.f32 %v483, 1.442695
    %v511 = vpow.pop %v510
    %v512 = vmul.f32 %v484, 1.442695
    %v513 = vpow.pop %v512
    %v514 = vmul.f32 %v485, 1.442695
    %v515 = vpow.pop %v514
    %v516 = vmul.f32 %v486, 1.442695
    %v517 = vpow.pop %v516
    %v518 = vmul.f32 %v487, 1.442695
    %v519 = vpow.pop %v518
    %v520 = vsel %vm423, %v489, 0.0
    %521 = vadd.xlane.f32.xlu0 %v520
    %v522 = vpop.xlane.xlu0 %521
    %v523 = vsel %vm423, %v491, 0.0
    %524 = vadd.xlane.f32.xlu0 %v523
    %v525 = vpop.xlane.xlu0 %524
    %v526 = vsel %vm423, %v493, 0.0
    %527 = vadd.xlane.f32.xlu0 %v526
    %v528 = vpop.xlane.xlu0 %527
    %v529 = vsel %vm423, %v495, 0.0
    %530 = vadd.xlane.f32.xlu0 %v529
    %v531 = vpop.xlane.xlu0 %530
    %v532 = vsel %vm423, %v497, 0.0
    %533 = vadd.xlane.f32.xlu0 %v532
    %v534 = vpop.xlane.xlu0 %533
    %v535 = vsel %vm423, %v499, 0.0
    %536 = vadd.xlane.f32.xlu0 %v535
    %v537 = vpop.xlane.xlu0 %536
    %v538 = vsel %vm423, %v501, 0.0
    %539 = vadd.xlane.f32.xlu0 %v538
    %v540 = vpop.xlane.xlu0 %539
    %v541 = vsel %vm423, %v503, 0.0
    %542 = vadd.xlane.f32.xlu0 %v541
    %v543 = vpop.xlane.xlu0 %542
    %v544 = vsel %vm423, %v505, 0.0
    %545 = vadd.xlane.f32.xlu0 %v544
    %v546 = vpop.xlane.xlu0 %545
    %v547 = vsel %vm423, %v507, 0.0
    %548 = vadd.xlane.f32.xlu0 %v547
    %v549 = vpop.xlane.xlu0 %548
    %v550 = vsel %vm423, %v509, 0.0
    %551 = vadd.xlane.f32.xlu0 %v550
    %v552 = vpop.xlane.xlu0 %551
    %v553 = vsel %vm423, %v511, 0.0
    %554 = vadd.xlane.f32.xlu0 %v553
    %v555 = vpop.xlane.xlu0 %554
    %v556 = vsel %vm423, %v513, 0.0
    %557 = vadd.xlane.f32.xlu0 %v556
    %v558 = vpop.xlane.xlu0 %557
    %v559 = vsel %vm423, %v515, 0.0
    %560 = vadd.xlane.f32.xlu0 %v559
    %v561 = vpop.xlane.xlu0 %560
    %v562 = vsel %vm423, %v517, 0.0
    %563 = vadd.xlane.f32.xlu0 %v562
    %v564 = vpop.xlane.xlu0 %563
    %v565 = vsel %vm423, %v519, 0.0
    %566 = vadd.xlane.f32.xlu0 %v565
    %v567 = vpop.xlane.xlu0 %566
    %v568 = vrcp.pop %v522
    %v569 = vrcp.pop %v525
    %v570 = vrcp.pop %v528
    %v571 = vrcp.pop %v531
    %v572 = vrcp.pop %v534
    %v573 = vrcp.pop %v537
    %v574 = vrcp.pop %v540
    %v575 = vrcp.pop %v543
    %v576 = vrcp.pop %v546
    %v577 = vrcp.pop %v549
    %v578 = vrcp.pop %v552
    %v579 = vrcp.pop %v555
    %v580 = vrcp.pop %v558
    %v581 = vrcp.pop %v561
    %v582 = vrcp.pop %v564
    %v583 = vrcp.pop %v567
    %v584 = vmul.f32 %v489, %v568
    %v585 = vmul.f32 %v491, %v569
    %v586 = vmul.f32 %v493, %v570
    %v587 = vmul.f32 %v495, %v571
    %v588 = vmul.f32 %v497, %v572
    %v589 = vmul.f32 %v499, %v573
    %v590 = vmul.f32 %v501, %v574
    %v591 = vmul.f32 %v503, %v575
    %v592 = vmul.f32 %v505, %v576
    %v593 = vmul.f32 %v507, %v577
    %v594 = vmul.f32 %v509, %v578
    %v595 = vmul.f32 %v511, %v579
    %v596 = vmul.f32 %v513, %v580
    %v597 = vmul.f32 %v515, %v581
    %v598 = vmul.f32 %v517, %v582
    %v599 = vmul.f32 %v519, %v583
    %v600 = vpack.c.bf16 %v584, %v584
    %v601 = vpack.c.bf16 %v585, %v585
    %v602 = vpack.c.bf16 %v586, %v586
    %v603 = vpack.c.bf16 %v587, %v587
    %v604 = vpack.c.bf16 %v588, %v588
    %v605 = vpack.c.bf16 %v589, %v589
    %v606 = vpack.c.bf16 %v590, %v590
    %v607 = vpack.c.bf16 %v591, %v591
    %v608 = vpack.c.bf16 %v592, %v592
    %v609 = vpack.c.bf16 %v593, %v593
    %v610 = vpack.c.bf16 %v594, %v594
    %v611 = vpack.c.bf16 %v595, %v595
    %v612 = vpack.c.bf16 %v596, %v596
    %v613 = vpack.c.bf16 %v597, %v597
    %v614 = vpack.c.bf16 %v598, %v598
    %v615 = vpack.c.bf16 %v599, %v599
    %v618 = vunpack.c.l.b16 %v600
    %v619 = vunpack.c.l.b16 %v601
    %v620 = vpack.c.b16 %v619, %v618
    %621 = vrot.lane.b32.xlu0 %v194, 64
    %v622 = vpop.permute.xlu0 %621
    %v625 = vsel %vm423, %v620, 0
    %627 = vmatpush.bf16.msra.mxu0 0
    %628 = vmatpush.bf16.msra.mxu0 0
    %629 = vmatpush.bf16.msra.mxu0 0
    %630 = vmatpush.bf16.msra.mxu0 0
    %631 = vmatpush.bf16.msra.mxu0 0
    %632 = vmatpush.bf16.msra.mxu0 0
    %633 = vmatpush.bf16.msra.mxu0 0
    %634 = vmatpush.bf16.msra.mxu0 %v622
    %635 = vmatmul.bf16.gmra.mxu0 %v625
    %v636 = vpop.f32.mrf.mxu0
    %v637 = vadd.f32 0.0, %v636
    %v638 = vpop.f32.mrf.mxu0
    %v639 = vadd.f32 0.0, %v638
    %640 = vdwg.mxu0
    %v643 = vunpack.c.l.b16 %v602
    %v644 = vunpack.c.l.b16 %v603
    %v645 = vpack.c.b16 %v644, %v643
    %646 = vrot.lane.b32.xlu0 %v222, 64
    %v647 = vpop.permute.xlu0 %646
    %v650 = vsel %vm423, %v645, 0
    %652 = vmatpush.bf16.msra.mxu0 0
    %653 = vmatpush.bf16.msra.mxu0 0
    %654 = vmatpush.bf16.msra.mxu0 0
    %655 = vmatpush.bf16.msra.mxu0 0
    %656 = vmatpush.bf16.msra.mxu0 0
    %657 = vmatpush.bf16.msra.mxu0 0
    %658 = vmatpush.bf16.msra.mxu0 0
    %659 = vmatpush.bf16.msra.mxu0 %v647
    %660 = vmatmul.bf16.gmra.mxu0 %v650
    %v661 = vpop.f32.mrf.mxu0
    %v662 = vadd.f32 0.0, %v661
    %v663 = vpop.f32.mrf.mxu0
    %v664 = vadd.f32 0.0, %v663
    %665 = vdwg.mxu0
    %v668 = vunpack.c.l.b16 %v604
    %v669 = vunpack.c.l.b16 %v605
    %v670 = vpack.c.b16 %v669, %v668
    %671 = vrot.lane.b32.xlu0 %v249, 64
    %v672 = vpop.permute.xlu0 %671
    %v675 = vsel %vm423, %v670, 0
    %677 = vmatpush.bf16.msra.mxu0 0
    %678 = vmatpush.bf16.msra.mxu0 0
    %679 = vmatpush.bf16.msra.mxu0 0
    %680 = vmatpush.bf16.msra.mxu0 0
    %681 = vmatpush.bf16.msra.mxu0 0
    %682 = vmatpush.bf16.msra.mxu0 0
    %683 = vmatpush.bf16.msra.mxu0 0
    %684 = vmatpush.bf16.msra.mxu0 %v672
    %685 = vmatmul.bf16.gmra.mxu0 %v675
    %v686 = vpop.f32.mrf.mxu0
    %v687 = vadd.f32 0.0, %v686
    %v688 = vpop.f32.mrf.mxu0
    %v689 = vadd.f32 0.0, %v688
    %690 = vdwg.mxu0
    %v693 = vunpack.c.l.b16 %v606
    %v694 = vunpack.c.l.b16 %v607
    %v695 = vpack.c.b16 %v694, %v693
    %696 = vrot.lane.b32.xlu0 %v276, 64
    %v697 = vpop.permute.xlu0 %696
    %v700 = vsel %vm423, %v695, 0
    %702 = vmatpush.bf16.msra.mxu0 0
    %703 = vmatpush.bf16.msra.mxu0 0
    %704 = vmatpush.bf16.msra.mxu0 0
    %705 = vmatpush.bf16.msra.mxu0 0
    %706 = vmatpush.bf16.msra.mxu0 0
    %707 = vmatpush.bf16.msra.mxu0 0
    %708 = vmatpush.bf16.msra.mxu0 0
    %709 = vmatpush.bf16.msra.mxu0 %v697
    %710 = vmatmul.bf16.gmra.mxu0 %v700
    %v711 = vpop.f32.mrf.mxu0
    %v712 = vadd.f32 0.0, %v711
    %v713 = vpop.f32.mrf.mxu0
    %v714 = vadd.f32 0.0, %v713
    %715 = vdwg.mxu0
    %v718 = vunpack.c.l.b16 %v608
    %v719 = vunpack.c.l.b16 %v609
    %v720 = vpack.c.b16 %v719, %v718
    %721 = vrot.lane.b32.xlu0 %v303, 64
    %v722 = vpop.permute.xlu0 %721
    %v725 = vsel %vm423, %v720, 0
    %727 = vmatpush.bf16.msra.mxu0 0
    %728 = vmatpush.bf16.msra.mxu0 0
    %729 = vmatpush.bf16.msra.mxu0 0
    %730 = vmatpush.bf16.msra.mxu0 0
    %731 = vmatpush.bf16.msra.mxu0 0
    %732 = vmatpush.bf16.msra.mxu0 0
    %733 = vmatpush.bf16.msra.mxu0 0
    %734 = vmatpush.bf16.msra.mxu0 %v722
    %735 = vmatmul.bf16.gmra.mxu0 %v725
    %v736 = vpop.f32.mrf.mxu0
    %v737 = vadd.f32 0.0, %v736
    %v738 = vpop.f32.mrf.mxu0
    %v739 = vadd.f32 0.0, %v738
    %740 = vdwg.mxu0
    %v743 = vunpack.c.l.b16 %v610
    %v744 = vunpack.c.l.b16 %v611
    %v745 = vpack.c.b16 %v744, %v743
    %746 = vrot.lane.b32.xlu0 %v330, 64
    %v747 = vpop.permute.xlu0 %746
    %v750 = vsel %vm423, %v745, 0
    %752 = vmatpush.bf16.msra.mxu0 0
    %753 = vmatpush.bf16.msra.mxu0 0
    %754 = vmatpush.bf16.msra.mxu0 0
    %755 = vmatpush.bf16.msra.mxu0 0
    %756 = vmatpush.bf16.msra.mxu0 0
    %757 = vmatpush.bf16.msra.mxu0 0
    %758 = vmatpush.bf16.msra.mxu0 0
    %759 = vmatpush.bf16.msra.mxu0 %v747
    %760 = vmatmul.bf16.gmra.mxu0 %v750
    %v761 = vpop.f32.mrf.mxu0
    %v762 = vadd.f32 0.0, %v761
    %v763 = vpop.f32.mrf.mxu0
    %v764 = vadd.f32 0.0, %v763
    %765 = vdwg.mxu0
    %v768 = vunpack.c.l.b16 %v612
    %v769 = vunpack.c.l.b16 %v613
    %v770 = vpack.c.b16 %v769, %v768
    %771 = vrot.lane.b32.xlu0 %v357, 64
    %v772 = vpop.permute.xlu0 %771
    %v775 = vsel %vm423, %v770, 0
    %777 = vmatpush.bf16.msra.mxu0 0
    %778 = vmatpush.bf16.msra.mxu0 0
    %779 = vmatpush.bf16.msra.mxu0 0
    %780 = vmatpush.bf16.msra.mxu0 0
    %781 = vmatpush.bf16.msra.mxu0 0
    %782 = vmatpush.bf16.msra.mxu0 0
    %783 = vmatpush.bf16.msra.mxu0 0
    %784 = vmatpush.bf16.msra.mxu0 %v772
    %785 = vmatmul.bf16.gmra.mxu0 %v775
    %v786 = vpop.f32.mrf.mxu0
    %v787 = vadd.f32 0.0, %v786
    %v788 = vpop.f32.mrf.mxu0
    %v789 = vadd.f32 0.0, %v788
    %790 = vdwg.mxu0
    %v793 = vunpack.c.l.b16 %v614
    %v794 = vunpack.c.l.b16 %v615
    %v795 = vpack.c.b16 %v794, %v793
    %796 = vrot.lane.b32.xlu0 %v384, 64
    %v797 = vpop.permute.xlu0 %796
    %v800 = vsel %vm423, %v795, 0
    %802 = vmatpush.bf16.msra.mxu0 0
    %803 = vmatpush.bf16.msra.mxu0 0
    %804 = vmatpush.bf16.msra.mxu0 0
    %805 = vmatpush.bf16.msra.mxu0 0
    %806 = vmatpush.bf16.msra.mxu0 0
    %807 = vmatpush.bf16.msra.mxu0 0
    %808 = vmatpush.bf16.msra.mxu0 0
    %809 = vmatpush.bf16.msra.mxu0 %v797
    %810 = vmatmul.bf16.gmra.mxu0 %v800
    %v811 = vpop.f32.mrf.mxu0
    %v812 = vadd.f32 0.0, %v811
    %v813 = vpop.f32.mrf.mxu0
    %v814 = vadd.f32 0.0, %v813
    %815 = vdwg.mxu0
    %820 = vrot.lane.b32.xlu0 %v687, 8
    %v821 = vpop.permute.xlu0 %820
    %822 = vrot.lane.b32.xlu0 %v689, 8
    %v823 = vpop.permute.xlu0 %822
    %824 = vrot.lane.b32.xlu0 %v712, 8
    %v825 = vpop.permute.xlu0 %824
    %826 = vrot.lane.b32.xlu0 %v714, 8
    %v827 = vpop.permute.xlu0 %826
    %836 = vrot.lane.b32.xlu0 %v737, 16
    %v837 = vpop.permute.xlu0 %836
    %838 = vrot.lane.b32.xlu0 %v739, 16
    %v839 = vpop.permute.xlu0 %838
    %840 = vrot.lane.b32.xlu0 %v762, 16
    %v841 = vpop.permute.xlu0 %840
    %842 = vrot.lane.b32.xlu0 %v764, 16
    %v843 = vpop.permute.xlu0 %842
    %852 = vrot.lane.b32.xlu0 %v787, 24
    %v853 = vpop.permute.xlu0 %852
    %854 = vrot.lane.b32.xlu0 %v789, 24
    %v855 = vpop.permute.xlu0 %854
    %856 = vrot.lane.b32.xlu0 %v812, 24
    %v857 = vpop.permute.xlu0 %856
    %858 = vrot.lane.b32.xlu0 %v814, 24
    %v859 = vpop.permute.xlu0 %858
    %v864 = vsel %vm197, %v637, %v821
    %v865 = vsel %vm197, %v639, %v823
    %v866 = vsel %vm197, %v662, %v825
    %v867 = vsel %vm197, %v664, %v827
    %v868 = vsel %vm423, %v864, %v837
    %v869 = vsel %vm423, %v865, %v839
    %v870 = vsel %vm423, %v866, %v841
    %v871 = vsel %vm423, %v867, %v843
    %vm872 = vcmask 195584
    %v873 = vsel %vm872, %v868, %v853
    %v874 = vsel %vm872, %v869, %v855
    %v875 = vsel %vm872, %v870, %v857
    %v876 = vsel %vm872, %v871, %v859
    %v877 = vpack.c.bf16 %v874, %v873
    %v878 = vpack.c.bf16 %v876, %v875
    %v879 = vld [vmem:[#allocation2] sm:$0xf]
    %v880 = vld [vmem:[#allocation2 + $0x4] sm:$0xf]
    %v881 = vld [vmem:[#allocation2 + $0x8] sm:$0xf]
    %v882 = vld [vmem:[#allocation2 + $0xc] sm:$0xf]
    %v883 = vld [vmem:[%s4] sm:$0x1]
    %v885 = vperm.slane %v883, 0
    %v891 = vunpack.c.l.b16 %v879
    %v892 = vunpack.c.l.b16 %v880
    %v893 = vunpack.c.l.b16 %v881
    %v894 = vunpack.c.l.b16 %v882
    %v895 = vpack.c.b16 %v892, %v891
    %v896 = vpack.c.b16 %v894, %v893
    %v900 = vsel %vm108, %v877, 0
    %v903 = vsel %vm108, %v878, 0
    %905 = vmatpush.bf16.msra.mxu0 0
    %906 = vmatpush.bf16.msra.mxu0 0
    %907 = vmatpush.bf16.msra.mxu0 0
    %908 = vmatpush.bf16.msra.mxu0 0
    %909 = vmatpush.bf16.msra.mxu0 0
    %910 = vmatpush.bf16.msra.mxu0 0
    %911 = vmatpush.bf16.msra.mxu0 %v896
    %912 = vmatpush.bf16.msra.mxu0 %v895
    %913 = vmatmul.bf16.gmra.mxu0 %v900
    %v914 = vpop.f32.mrf.mxu0
    %v915 = vadd.f32 %v885, %v914
    %v916 = vpop.f32.mrf.mxu0
    %v917 = vadd.f32 %v885, %v916
    %918 = vmatmul.bf16.gmra.mxu0 %v903
    %v919 = vpop.f32.mrf.mxu0
    %v920 = vadd.f32 %v885, %v919
    %v921 = vpop.f32.mrf.mxu0
    %v922 = vadd.f32 %v885, %v921
    %923 = vdwg.mxu0
    %v924 = vadd.f32 %v78, %v915
    %v925 = vadd.f32 %v79, %v917
    %v926 = vadd.f32 %v80, %v920
    %v927 = vadd.f32 %v81, %v922
    %v929 = vsel %vm108, %v82, 0
    %v932 = vsel %vm108, %v83, 0
    %v935 = vsel %vm108, %v84, 0
    %v938 = vsel %vm108, %v85, 0
    %940 = vmatpush.msra.mxu0 0.0
    %941 = vmatpush.msra.mxu0 0.0
    %942 = vmatpush.msra.mxu0 0.0
    %943 = vmatpush.msra.mxu0 0.0
    %944 = vmatpush.msra.mxu0 0.0
    %945 = vmatpush.msra.mxu0 0.0
    %946 = vmatpush.msra.mxu0 0.0
    %947 = vmatpush.msra.mxu0 0.0
    %948 = vmatpush.msra.mxu0 0.0
    %949 = vmatpush.msra.mxu0 0.0
    %950 = vmatpush.msra.mxu0 0.0
    %951 = vmatpush.msra.mxu0 0.0
    %952 = vmatpush.msra.mxu0 %v927
    %953 = vmatpush.msra.mxu0 %v926
    %954 = vmatpush.msra.mxu0 %v925
    %955 = vmatpush.msra.mxu0 %v924
    %956 = vmatmul.f32.gmra.mxu0 %v929
    %v957 = vpop.f32.mrf.mxu0
    %v958 = vadd.f32 0.0, %v957
    %959 = vmatmul.f32.gmra.mxu0 %v932
    %v960 = vpop.f32.mrf.mxu0
    %v961 = vadd.f32 0.0, %v960
    %962 = vmatmul.f32.gmra.mxu0 %v935
    %v963 = vpop.f32.mrf.mxu0
    %v964 = vadd.f32 0.0, %v963
    %965 = vmatmul.f32.gmra.mxu0 %v938
    %v966 = vpop.f32.mrf.mxu0
    %v967 = vadd.f32 0.0, %v966
    %968 = vdwg.mxu0
    %v969 = vsub.f32 %v924, %v958
    %v970 = vsub.f32 %v925, %v961
    %v971 = vsub.f32 %v926, %v964
    %v972 = vsub.f32 %v927, %v967
    %v973 = vpack.c.bf16 %v970, %v969
    %v974 = vpack.c.bf16 %v972, %v971
    %v975 = vld [vmem:[#allocation5] sm:$0xf]
    %v976 = vld [vmem:[#allocation5 + $0x4] sm:$0xf]
    %v977 = vld [vmem:[#allocation5 + $0x8] sm:$0xf]
    %v978 = vld [vmem:[#allocation5 + $0xc] sm:$0xf]
    %v983 = vunpack.c.l.b16 %v975
    %v984 = vunpack.c.l.b16 %v976
    %v985 = vunpack.c.l.b16 %v977
    %v986 = vunpack.c.l.b16 %v978
    %v987 = vpack.c.b16 %v984, %v983
    %v988 = vpack.c.b16 %v986, %v985
    %v992 = vsel %vm108, %v973, 0
    %v995 = vsel %vm108, %v974, 0
    %997 = vmatpush.bf16.msra.mxu0 0
    %998 = vmatpush.bf16.msra.mxu0 0
    %999 = vmatpush.bf16.msra.mxu0 0
    %1000 = vmatpush.bf16.msra.mxu0 0
    %1001 = vmatpush.bf16.msra.mxu0 0
    %1002 = vmatpush.bf16.msra.mxu0 0
    %1003 = vmatpush.bf16.msra.mxu0 %v988
    %1004 = vmatpush.bf16.msra.mxu0 %v987
    %1005 = vmatmul.bf16.gmra.mxu0 %v992
    %v1006 = vpop.f32.mrf.mxu0
    %v1007 = vadd.f32 0.0, %v1006
    %v1008 = vpop.f32.mrf.mxu0
    %v1009 = vadd.f32 0.0, %v1008
    %1010 = vmatmul.bf16.gmra.mxu0 %v995
    %v1011 = vpop.f32.mrf.mxu0
    %v1012 = vadd.f32 0.0, %v1011
    %v1013 = vpop.f32.mrf.mxu0
    %v1014 = vadd.f32 0.0, %v1013
    %1015 = vdwg.mxu0
    %v1016 = vmax.f32 %v1007, 0.0
    %v1017 = vmax.f32 %v1009, 0.0
    %v1018 = vmax.f32 %v1012, 0.0
    %v1019 = vmax.f32 %v1014, 0.0
    %v1020 = vpack.c.bf16 %v1017, %v1016
    %v1021 = vpack.c.bf16 %v1019, %v1018
    %v1022 = vld [vmem:[%s6] sm:$0xf]
    %v1023 = vld [vmem:[%s6 + $0x4] sm:$0xf]
    %v1024 = vld [vmem:[%s6 + $0x8] sm:$0xf]
    %v1025 = vld [vmem:[%s6 + $0xc] sm:$0xf]
    %v1026 = vld [vmem:[%s6 + $0x10] sm:$0xf]
    %v1027 = vld [vmem:[%s6 + $0x14] sm:$0xf]
    %v1028 = vld [vmem:[%s6 + $0x18] sm:$0xf]
    %v1029 = vld [vmem:[%s6 + $0x1c] sm:$0xf]
    %v1038 = vunpack.c.l.b16 %v1022
    %v1039 = vunpack.c.l.b16 %v1023
    %v1040 = vunpack.c.l.b16 %v1024
    %v1041 = vunpack.c.l.b16 %v1025
    %v1042 = vunpack.c.l.b16 %v1026
    %v1043 = vunpack.c.l.b16 %v1027
    %v1044 = vunpack.c.l.b16 %v1028
    %v1045 = vunpack.c.l.b16 %v1029
    %v1046 = vpack.c.b16 %v1039, %v1038
    %v1047 = vpack.c.b16 %v1041, %v1040
    %v1048 = vpack.c.b16 %v1043, %v1042
    %v1049 = vpack.c.b16 %v1045, %v1044
    %vm1054 = vcmask 523264
    %v1056 = vsel %vm1054, %v1020, 0
    %v1059 = vsel %vm1054, %v1021, 0
    %1061 = vmatpush.bf16.msra.mxu0 0
    %1062 = vmatpush.bf16.msra.mxu0 0
    %1063 = vmatpush.bf16.msra.mxu0 0
    %1064 = vmatpush.bf16.msra.mxu0 0
    %1065 = vmatpush.bf16.msra.mxu0 %v1049
    %1066 = vmatpush.bf16.msra.mxu0 %v1048
    %1067 = vmatpush.bf16.msra.mxu0 %v1047
    %1068 = vmatpush.bf16.msra.mxu0 %v1046
    %1069 = vmatmul.bf16.gmra.mxu0 %v1056
    %v1070 = vpop.f32.mrf.mxu0
    %v1071 = vadd.f32 0.0, %v1070
    %v1072 = vpop.f32.mrf.mxu0
    %v1073 = vadd.f32 0.0, %v1072
    %1074 = vmatmul.bf16.gmra.mxu0 %v1059
    %v1075 = vpop.f32.mrf.mxu0
    %v1076 = vadd.f32 0.0, %v1075
    %v1077 = vpop.f32.mrf.mxu0
    %v1078 = vadd.f32 0.0, %v1077
    %1079 = vdwg.mxu0
    %v1080 = vadd.f32 %v969, %v1071
    %v1081 = vadd.f32 %v970, %v1073
    %v1082 = vadd.f32 %v971, %v1076
    %v1083 = vadd.f32 %v972, %v1078
    %1084 = vmatpush.msra.mxu0 0.0
    %1085 = vmatpush.msra.mxu0 0.0
    %1086 = vmatpush.msra.mxu0 0.0
    %1087 = vmatpush.msra.mxu0 0.0
    %1088 = vmatpush.msra.mxu0 0.0
    %1089 = vmatpush.msra.mxu0 0.0
    %1090 = vmatpush.msra.mxu0 0.0
    %1091 = vmatpush.msra.mxu0 0.0
    %1092 = vmatpush.msra.mxu0 0.0
    %1093 = vmatpush.msra.mxu0 0.0
    %1094 = vmatpush.msra.mxu0 0.0
    %1095 = vmatpush.msra.mxu0 0.0
    %1096 = vmatpush.msra.mxu0 %v1083
    %1097 = vmatpush.msra.mxu0 %v1082
    %1098 = vmatpush.msra.mxu0 %v1081
    %1099 = vmatpush.msra.mxu0 %v1080
    %1100 = vmatmul.f32.gmra.mxu0 %v929
    %v1101 = vpop.f32.mrf.mxu0
    %v1102 = vadd.f32 0.0, %v1101
    %1103 = vmatmul.f32.gmra.mxu0 %v932
    %v1104 = vpop.f32.mrf.mxu0
    %v1105 = vadd.f32 0.0, %v1104
    %1106 = vmatmul.f32.gmra.mxu0 %v935
    %v1107 = vpop.f32.mrf.mxu0
    %v1108 = vadd.f32 0.0, %v1107
    %1109 = vmatmul.f32.gmra.mxu0 %v938
    %v1110 = vpop.f32.mrf.mxu0
    %v1111 = vadd.f32 0.0, %v1110
    %1112 = vdwg.mxu0
    %v1113 = vsub.f32 %v1080, %v1102
    %v1114 = vsub.f32 %v1081, %v1105
    %v1115 = vsub.f32 %v1082, %v1108
    %v1116 = vsub.f32 %v1083, %v1111
    %1117 = vst.msk [vmem:[#allocation8] sm:$0xff] %vm108, %v1113
    %1118 = vst.msk [vmem:[#allocation8 + $0x8] sm:$0xff] %vm108, %v1114
    %1119 = vst.msk [vmem:[#allocation8 + $0x10] sm:$0xff] %vm108, %v1115
    %1120 = vst.msk [vmem:[#allocation8 + $0x18] sm:$0xff] %vm108, %v1116
    // Predicated region
    $region46: #{tpu_custom_call.1} parent=1 // pred_check
      _
    $region47: #{tpu_custom_call.1} parent=1 // pred_check_branch
      %1122 = sbr.rel (0) target = $region49
    $region48: #{tpu_custom_call.1} parent=1 // pred_region
      %1124 = vsyncadd [#allocation4], 0
      %s1125 = sshll.u32 [#allocation8], 4
      %s1126 = int_to_ptr.vmem [resolvable:$true] %s1125
      %s1127 = sshll.u32 %s8, 4
      %s1128 = int_to_ptr.hbm [resolvable:$true] %s1127
      %1133 = dma.vmem_to_hbm [thread:$0]  %s1126, 512, %s1128, [#allocation4], 128, 128, 8
    $region49: #{tpu_custom_call.1} parent=1 // pred_fallthru
      _
    // Predicated region
    $region50: #{tpu_custom_call.1} parent=1 // pred_check
      _
    $region51: #{tpu_custom_call.1} parent=1 // pred_check_branch
      %1135 = sbr.rel (0) target = $region53
    $region52: #{tpu_custom_call.1} parent=1 // pred_region
      %1137 = dma.done [#allocation4], 512
    $region53: #{tpu_custom_call.1} parent=1 // pred_fallthru
      _
    %1138 = vsyncpa [#allocation3], 1
    %1139 = vsyncpa [#allocation6], 1
    %1140 = vsyncpa [#allocation4], 1

</llo_original>
